<compile_context>
chip_gen: v7x
topology: tpu7x:2x2x1
jax: 0.10.0
libtpu: 0.0.40
codegen_flags: <defaults>
</compile_context>

<pallas_src>
import functools

import numpy as np
import jax
import jax.numpy as jnp
from jax.experimental import pallas as pl
from jax.experimental.pallas import tpu as pltpu


def _build_tap_masks(H, W):
    """(9, H*W) float32 validity masks (1.0 = in-bounds) for the 3x3 taps.

    Row t = kh*3 + kw masks the positions whose source pixel (h+kh-1, w+kw-1)
    falls outside the image ("same" zero padding).  Built host-side once so
    the kernel does no per-step iota / div / mod / compare work.
    """
    HW = H * W
    p = np.arange(HW)
    h_idx, w_idx = p // W, p % W
    rows = []
    for kh in range(3):
        for kw in range(3):
            dh, dw = kh - 1, kw - 1
            valid = np.ones(HW, dtype=bool)
            if dh == -1:
                valid &= h_idx >= 1
            elif dh == 1:
                valid &= h_idx <= H - 2
            if dw == -1:
                valid &= w_idx >= 1
            elif dw == 1:
                valid &= w_idx <= W - 2
            rows.append(valid.astype(np.float32))
    return jnp.asarray(np.stack(rows, axis=0))  # (9, HW)


def _choose_batch_block(B, HW, max_lanes_per_step=2048):
    """Batch elements per grid step.

    Cap by a lane budget (keeps the VMEM blocks small while still feeding the
    MXU / amortizing the ~0.35us per-grid-step overhead), and keep >= 2 grid
    steps whenever B >= 2 so "parallel" can use both TensorCores on v7x.
    """
    bb = max(1, max_lanes_per_step // max(HW, 1))
    bb = min(bb, B)
    if B >= 2:
        bb = min(bb, -(-B // 2))  # ceil(B/2) -> grid has at least 2 steps
    return max(bb, 1)


def _make_dense_kernel(x_ref, mask_ref, w_ref, b_ref, o_ref, m_ref, *, Cin, W):
    # x_ref:    (Bb, Cin_pad, HW)       Bb batch elements; channels (zero-padded
    #                                   to a multiple of 8) on sublanes, flat
    #                                   spatial (lane-dense) on lanes.
    # mask_ref: (9, HW)                 per-tap boundary masks (VMEM-resident).
    # w_ref:    (Cout, 9*Cin_pad)       column order (kh*3+kw)*Cin_pad + ci;
    #                                   padded columns are zero.
    # b_ref:    (Cout, 1)
    # o_ref:    (Bb, Cin+Cout, HW)      rows [0:Cin) = x passthrough,
    #                                   rows [Cin:)  = relu(conv(x) + b).
    # m_ref:    (Bb, 9*Cin_pad, HW)     f32 VMEM scratch holding the im2col.
    Bb, Cin_pad, HW = x_ref.shape
    Cout = w_ref.shape[0]

    x = x_ref[...]                                    # (Bb, Cin_pad, HW)
    # Free reshape (Cin_pad multiple of 8 keeps sublane tiling identical).
    x2 = x.reshape(Bb * Cin_pad, HW)
    masks = mask_ref[...]                             # (9, HW)

    # Build the im2col directly in VMEM scratch: each 3x3 tap is a lane roll
    # (XLU slot) of the flattened image, masked at image borders, written into
    # an 8-aligned sublane range.  No register-level concatenation.
    for kh in range(3):
        for kw in range(3):
            t = kh * 3 + kw
            dh, dw = kh - 1, kw - 1
            off = dh * W + dw                          # flattened source offset
            if off == 0:
                m_ref[:, t * Cin_pad:(t + 1) * Cin_pad, :] = x
            else:
                # roll(x, s)[i] == x[(i - s) mod HW]; we want x[i + off].
                shifted = pltpu.roll(x2, shift=(-off) % HW, axis=1)
                shifted = shifted * masks[t][None, :]  # zero out-of-bounds taps
                m_ref[:, t * Cin_pad:(t + 1) * Cin_pad, :] = shifted.reshape(
                    Bb, Cin_pad, HW)

    w = w_ref[...]
    b = b_ref[...]

    # Fused concat, part 1: x passthrough (drop the zero-padded channels).
    o_ref[:, :Cin, :] = x[:, :Cin, :]

    # Fused concat, part 2: one MXU matmul (K = 9*Cin_pad, f32 acc) per batch
    # element in the block, bias + ReLU on the VPU, direct lane-dense store.
    for bb in range(Bb):
        acc = jnp.dot(w, m_ref[bb], preferred_element_type=jnp.float32)
        acc = jnp.maximum(acc + b, 0.0)
        o_ref[bb, Cin:, :] = acc.astype(o_ref.dtype)


def make_dense_forward(x_nchw, weight, bias, *, max_lanes_per_step=2048):
    """MakeDense forward. x_nchw: (B, Cin, H, W); weight: (Cout, Cin, 3, 3);
    bias: (Cout,). Returns (B, Cin + Cout, H, W), matching
    torch.cat((x, relu(conv(x))), dim=1)."""
    B, Cin, H, W = x_nchw.shape
    Cout = weight.shape[0]
    HW = H * W
    Cin_pad = -(-Cin // 8) * 8                         # sublane-align channels

    # Free reshape (contiguous dims): NCHW -> (B, Cin, H*W); pad channels so
    # per-tap scratch rows and the input tile land on 8-sublane boundaries.
    x_flat = x_nchw.reshape(B, Cin, HW)
    if Cin_pad != Cin:
        x_flat = jnp.pad(x_flat, ((0, 0), (0, Cin_pad - Cin), (0, 0)))

    # (Cout, Cin, kh, kw) -> (Cout, kh, kw, Cin[pad]) -> (Cout, 9*Cin_pad);
    # column index (kh*3 + kw)*Cin_pad + ci matches the kernel's tap order.
    w_k = jnp.transpose(weight, (0, 2, 3, 1))
    if Cin_pad != Cin:
        w_k = jnp.pad(w_k, ((0, 0), (0, 0), (0, 0), (0, Cin_pad - Cin)))
    w_mat = w_k.reshape(Cout, 9 * Cin_pad)
    b_col = bias.reshape(Cout, 1)

    masks = _build_tap_masks(H, W)                     # (9, HW) float32

    # Batch amortization: Bb elements per grid step (>= 2 steps when B >= 2).
    bb = _choose_batch_block(B, HW, max_lanes_per_step)
    B_pad = -(-B // bb) * bb
    if B_pad != B:
        x_flat = jnp.pad(x_flat, ((0, B_pad - B), (0, 0), (0, 0)))

    out_flat = pl.pallas_call(
        functools.partial(_make_dense_kernel, Cin=Cin, W=W),
        out_shape=jax.ShapeDtypeStruct((B_pad, Cin + Cout, HW), x_nchw.dtype),
        grid=(B_pad // bb,),
        in_specs=[
            pl.BlockSpec((bb, Cin_pad, HW), lambda i: (i, 0, 0)),
            # Constant block indices -> masks/weights/bias stay VMEM-resident.
            pl.BlockSpec((9, HW), lambda i: (0, 0)),
            pl.BlockSpec((Cout, 9 * Cin_pad), lambda i: (0, 0)),
            pl.BlockSpec((Cout, 1), lambda i: (0, 0)),
        ],
        out_specs=pl.BlockSpec((bb, Cin + Cout, HW), lambda i: (i, 0, 0)),
        scratch_shapes=[pltpu.VMEM((bb, 9 * Cin_pad, HW), jnp.float32)],
        compiler_params=pltpu.CompilerParams(
            # Batch-group axis is independent -> megacore / v7x 2-TC sharding.
            # vmem_limit_bytes left at the per-generation default: blocks here
            # are tiny; re-derive it when strip tiling lands (see TODO above).
            dimension_semantics=("parallel",),
        ),
    )(x_flat, masks, w_mat, b_col)

    if B_pad != B:
        out_flat = out_flat[:B]
    return out_flat.reshape(B, Cin + Cout, H, W)


def _reference(x_nchw, weight, bias):
    # Pure-JAX reference (NCHW conv) for correctness check.
    out = jax.lax.conv_general_dilated(
        x_nchw, weight,
        window_strides=(1, 1), padding=((1, 1), (1, 1)),
        dimension_numbers=("NCHW", "OIHW", "NCHW"),
    ) + bias[None, :, None, None]
    out = jax.nn.relu(out)
    return jnp.concatenate([x_nchw, out], axis=1)


if __name__ == "__main__":
    Cin, growth_rate, H, W, k = 4, 8, 16, 16, 3

    key = jax.random.PRNGKey(0)
    kx, kw, kb, kx2 = jax.random.split(key, 4)
    # Deterministic synthetic parameters (Conv2d(Cin, growth_rate, 3, pad=1)).
    weight = jax.random.normal(kw, (growth_rate, Cin, k, k), dtype=jnp.float32) * 0.1
    bias = jax.random.normal(kb, (growth_rate,), dtype=jnp.float32) * 0.1

    # Main case: batch=2 (grid of 2 steps, one element per step).
    x = jax.random.normal(kx, (2, Cin, H, W), dtype=jnp.float32)
    out = make_dense_forward(x, weight, bias)
    jax.block_until_ready(out)
    ref = _reference(x, weight, bias)
    assert out.shape == (2, Cin + growth_rate, H, W), out.shape
    assert jnp.allclose(out, ref, atol=1e-4, rtol=1e-4), "mismatch vs reference (B=2)"

    # Second case: batch=5 exercises batch folding (Bb=3) + batch padding.
    x2 = jax.random.normal(kx2, (5, Cin, H, W), dtype=jnp.float32)
    out2 = make_dense_forward(x2, weight, bias)
    jax.block_until_ready(out2)
    ref2 = _reference(x2, weight, bias)
    assert out2.shape == (5, Cin + growth_rate, H, W), out2.shape
    assert jnp.allclose(out2, ref2, atol=1e-4, rtol=1e-4), "mismatch vs reference (B=5)"

    print("KERNEL_OK")
</pallas_src>

<mosaic_0001>
module attributes {stable_mosaic.version = 11 : i64} {
  func.func @_make_dense_kernel(%arg0: i32, %arg1: memref<1x8x256xf32, #tpu.memory_space<vmem>>, %arg2: memref<9x256xf32, #tpu.memory_space<vmem>>, %arg3: memref<8x72xf32, #tpu.memory_space<vmem>>, %arg4: memref<8x1xf32, #tpu.memory_space<vmem>>, %arg5: memref<1x12x256xf32, #tpu.memory_space<vmem>>, %arg6: memref<1x72x256xf32, #tpu.memory_space<vmem>>) attributes {dimension_semantics = [#tpu.dimension_semantics<parallel>], iteration_bounds = array<i64: 2>, scalar_prefetch = 0 : i64, scratch_operands = 1 : i64, tpu.core_type = #tpu.core_type<tc>, window_params = [{transform_indices = @transform_0, window_bounds = array<i64: 1, 8, 256>}, {pipeline_mode = #tpu.pipeline_mode<synchronous>, transform_indices = @transform_1, window_bounds = array<i64: 9, 256>}, {pipeline_mode = #tpu.pipeline_mode<synchronous>, transform_indices = @transform_2, window_bounds = array<i64: 8, 72>}, {pipeline_mode = #tpu.pipeline_mode<synchronous>, transform_indices = @transform_3, window_bounds = array<i64: 8, 1>}, {transform_indices = @transform_4, window_bounds = array<i64: 1, 12, 256>}]} {
    %c0 = arith.constant 0 : index
    %c0_0 = arith.constant 0 : index
    %c0_1 = arith.constant 0 : index
    %0 = vector.load %arg1[%c0, %c0_0, %c0_1] : memref<1x8x256xf32, #tpu.memory_space<vmem>>, vector<1x8x256xf32>
    %1 = vector.shape_cast %0 : vector<1x8x256xf32> to vector<8x256xf32>
    %c0_2 = arith.constant 0 : index
    %c0_3 = arith.constant 0 : index
    %2 = vector.load %arg2[%c0_2, %c0_3] : memref<9x256xf32, #tpu.memory_space<vmem>>, vector<9x256xf32>
    %c17_i32 = arith.constant 17 : i32
    %3 = tpu.dynamic_rotate %1 by %c17_i32 dim 1 : vector<8x256xf32>, i32 -> vector<8x256xf32>
    %4 = vector.extract_strided_slice %2 {offsets = [0, 0], sizes = [1, 256], strides = [1, 1]} : vector<9x256xf32> to vector<1x256xf32>
    %5 = vector.shape_cast %4 : vector<1x256xf32> to vector<256xf32>
    %6 = vector.shape_cast %5 : vector<256xf32> to vector<1x256xf32>
    %7 = vector.broadcast %6 : vector<1x256xf32> to vector<8x256xf32>
    %8 = arith.mulf %3, %7 : vector<8x256xf32>
    %9 = vector.shape_cast %8 : vector<8x256xf32> to vector<1x8x256xf32>
    %c0_4 = arith.constant 0 : index
    %c0_5 = arith.constant 0 : index
    %c0_6 = arith.constant 0 : index
    %10 = vector.load %arg6[%c0_4, %c0_5, %c0_6] : memref<1x72x256xf32, #tpu.memory_space<vmem>>, vector<1x8x256xf32>
    tpu.vector_store %arg6[%c0_4, %c0_5, %c0_6], %9 {strides = array<i32>} : memref<1x72x256xf32, #tpu.memory_space<vmem>>, vector<1x8x256xf32>,
    %c16_i32 = arith.constant 16 : i32
    %11 = tpu.dynamic_rotate %1 by %c16_i32 dim 1 : vector<8x256xf32>, i32 -> vector<8x256xf32>
    %12 = vector.extract_strided_slice %2 {offsets = [1, 0], sizes = [1, 256], strides = [1, 1]} : vector<9x256xf32> to vector<1x256xf32>
    %13 = vector.shape_cast %12 : vector<1x256xf32> to vector<256xf32>
    %14 = vector.shape_cast %13 : vector<256xf32> to vector<1x256xf32>
    %15 = vector.broadcast %14 : vector<1x256xf32> to vector<8x256xf32>
    %16 = arith.mulf %11, %15 : vector<8x256xf32>
    %17 = vector.shape_cast %16 : vector<8x256xf32> to vector<1x8x256xf32>
    %c0_7 = arith.constant 0 : index
    %c8 = arith.constant 8 : index
    %c0_8 = arith.constant 0 : index
    %18 = vector.load %arg6[%c0_7, %c8, %c0_8] : memref<1x72x256xf32, #tpu.memory_space<vmem>>, vector<1x8x256xf32>
    tpu.vector_store %arg6[%c0_7, %c8, %c0_8], %17 {strides = array<i32>} : memref<1x72x256xf32, #tpu.memory_space<vmem>>, vector<1x8x256xf32>,
    %c15_i32 = arith.constant 15 : i32
    %19 = tpu.dynamic_rotate %1 by %c15_i32 dim 1 : vector<8x256xf32>, i32 -> vector<8x256xf32>
    %20 = vector.extract_strided_slice %2 {offsets = [2, 0], sizes = [1, 256], strides = [1, 1]} : vector<9x256xf32> to vector<1x256xf32>
    %21 = vector.shape_cast %20 : vector<1x256xf32> to vector<256xf32>
    %22 = vector.shape_cast %21 : vector<256xf32> to vector<1x256xf32>
    %23 = vector.broadcast %22 : vector<1x256xf32> to vector<8x256xf32>
    %24 = arith.mulf %19, %23 : vector<8x256xf32>
    %25 = vector.shape_cast %24 : vector<8x256xf32> to vector<1x8x256xf32>
    %c0_9 = arith.constant 0 : index
    %c16 = arith.constant 16 : index
    %c0_10 = arith.constant 0 : index
    %26 = vector.load %arg6[%c0_9, %c16, %c0_10] : memref<1x72x256xf32, #tpu.memory_space<vmem>>, vector<1x8x256xf32>
    tpu.vector_store %arg6[%c0_9, %c16, %c0_10], %25 {strides = array<i32>} : memref<1x72x256xf32, #tpu.memory_space<vmem>>, vector<1x8x256xf32>,
    %c1_i32 = arith.constant 1 : i32
    %27 = tpu.dynamic_rotate %1 by %c1_i32 dim 1 : vector<8x256xf32>, i32 -> vector<8x256xf32>
    %28 = vector.extract_strided_slice %2 {offsets = [3, 0], sizes = [1, 256], strides = [1, 1]} : vector<9x256xf32> to vector<1x256xf32>
    %29 = vector.shape_cast %28 : vector<1x256xf32> to vector<256xf32>
    %30 = vector.shape_cast %29 : vector<256xf32> to vector<1x256xf32>
    %31 = vector.broadcast %30 : vector<1x256xf32> to vector<8x256xf32>
    %32 = arith.mulf %27, %31 : vector<8x256xf32>
    %33 = vector.shape_cast %32 : vector<8x256xf32> to vector<1x8x256xf32>
    %c0_11 = arith.constant 0 : index
    %c24 = arith.constant 24 : index
    %c0_12 = arith.constant 0 : index
    %34 = vector.load %arg6[%c0_11, %c24, %c0_12] : memref<1x72x256xf32, #tpu.memory_space<vmem>>, vector<1x8x256xf32>
    tpu.vector_store %arg6[%c0_11, %c24, %c0_12], %33 {strides = array<i32>} : memref<1x72x256xf32, #tpu.memory_space<vmem>>, vector<1x8x256xf32>,
    %c0_13 = arith.constant 0 : index
    %c32 = arith.constant 32 : index
    %c0_14 = arith.constant 0 : index
    %35 = vector.load %arg6[%c0_13, %c32, %c0_14] : memref<1x72x256xf32, #tpu.memory_space<vmem>>, vector<1x8x256xf32>
    tpu.vector_store %arg6[%c0_13, %c32, %c0_14], %0 {strides = array<i32>} : memref<1x72x256xf32, #tpu.memory_space<vmem>>, vector<1x8x256xf32>,
    %c255_i32 = arith.constant 255 : i32
    %36 = tpu.dynamic_rotate %1 by %c255_i32 dim 1 : vector<8x256xf32>, i32 -> vector<8x256xf32>
    %37 = vector.extract_strided_slice %2 {offsets = [5, 0], sizes = [1, 256], strides = [1, 1]} : vector<9x256xf32> to vector<1x256xf32>
    %38 = vector.shape_cast %37 : vector<1x256xf32> to vector<256xf32>
    %39 = vector.shape_cast %38 : vector<256xf32> to vector<1x256xf32>
    %40 = vector.broadcast %39 : vector<1x256xf32> to vector<8x256xf32>
    %41 = arith.mulf %36, %40 : vector<8x256xf32>
    %42 = vector.shape_cast %41 : vector<8x256xf32> to vector<1x8x256xf32>
    %c0_15 = arith.constant 0 : index
    %c40 = arith.constant 40 : index
    %c0_16 = arith.constant 0 : index
    %43 = vector.load %arg6[%c0_15, %c40, %c0_16] : memref<1x72x256xf32, #tpu.memory_space<vmem>>, vector<1x8x256xf32>
    tpu.vector_store %arg6[%c0_15, %c40, %c0_16], %42 {strides = array<i32>} : memref<1x72x256xf32, #tpu.memory_space<vmem>>, vector<1x8x256xf32>,
    %c241_i32 = arith.constant 241 : i32
    %44 = tpu.dynamic_rotate %1 by %c241_i32 dim 1 : vector<8x256xf32>, i32 -> vector<8x256xf32>
    %45 = vector.extract_strided_slice %2 {offsets = [6, 0], sizes = [1, 256], strides = [1, 1]} : vector<9x256xf32> to vector<1x256xf32>
    %46 = vector.shape_cast %45 : vector<1x256xf32> to vector<256xf32>
    %47 = vector.shape_cast %46 : vector<256xf32> to vector<1x256xf32>
    %48 = vector.broadcast %47 : vector<1x256xf32> to vector<8x256xf32>
    %49 = arith.mulf %44, %48 : vector<8x256xf32>
    %50 = vector.shape_cast %49 : vector<8x256xf32> to vector<1x8x256xf32>
    %c0_17 = arith.constant 0 : index
    %c48 = arith.constant 48 : index
    %c0_18 = arith.constant 0 : index
    %51 = vector.load %arg6[%c0_17, %c48, %c0_18] : memref<1x72x256xf32, #tpu.memory_space<vmem>>, vector<1x8x256xf32>
    tpu.vector_store %arg6[%c0_17, %c48, %c0_18], %50 {strides = array<i32>} : memref<1x72x256xf32, #tpu.memory_space<vmem>>, vector<1x8x256xf32>,
    %c240_i32 = arith.constant 240 : i32
    %52 = tpu.dynamic_rotate %1 by %c240_i32 dim 1 : vector<8x256xf32>, i32 -> vector<8x256xf32>
    %53 = vector.extract_strided_slice %2 {offsets = [7, 0], sizes = [1, 256], strides = [1, 1]} : vector<9x256xf32> to vector<1x256xf32>
    %54 = vector.shape_cast %53 : vector<1x256xf32> to vector<256xf32>
    %55 = vector.shape_cast %54 : vector<256xf32> to vector<1x256xf32>
    %56 = vector.broadcast %55 : vector<1x256xf32> to vector<8x256xf32>
    %57 = arith.mulf %52, %56 : vector<8x256xf32>
    %58 = vector.shape_cast %57 : vector<8x256xf32> to vector<1x8x256xf32>
    %c0_19 = arith.constant 0 : index
    %c56 = arith.constant 56 : index
    %c0_20 = arith.constant 0 : index
    %59 = vector.load %arg6[%c0_19, %c56, %c0_20] : memref<1x72x256xf32, #tpu.memory_space<vmem>>, vector<1x8x256xf32>
    tpu.vector_store %arg6[%c0_19, %c56, %c0_20], %58 {strides = array<i32>} : memref<1x72x256xf32, #tpu.memory_space<vmem>>, vector<1x8x256xf32>,
    %c239_i32 = arith.constant 239 : i32
    %60 = tpu.dynamic_rotate %1 by %c239_i32 dim 1 : vector<8x256xf32>, i32 -> vector<8x256xf32>
    %61 = vector.extract_strided_slice %2 {offsets = [8, 0], sizes = [1, 256], strides = [1, 1]} : vector<9x256xf32> to vector<1x256xf32>
    %62 = vector.shape_cast %61 : vector<1x256xf32> to vector<256xf32>
    %63 = vector.shape_cast %62 : vector<256xf32> to vector<1x256xf32>
    %64 = vector.broadcast %63 : vector<1x256xf32> to vector<8x256xf32>
    %65 = arith.mulf %60, %64 : vector<8x256xf32>
    %66 = vector.shape_cast %65 : vector<8x256xf32> to vector<1x8x256xf32>
    %c0_21 = arith.constant 0 : index
    %c64 = arith.constant 64 : index
    %c0_22 = arith.constant 0 : index
    %67 = vector.load %arg6[%c0_21, %c64, %c0_22] : memref<1x72x256xf32, #tpu.memory_space<vmem>>, vector<1x8x256xf32>
    tpu.vector_store %arg6[%c0_21, %c64, %c0_22], %66 {strides = array<i32>} : memref<1x72x256xf32, #tpu.memory_space<vmem>>, vector<1x8x256xf32>,
    %c0_23 = arith.constant 0 : index
    %c0_24 = arith.constant 0 : index
    %68 = vector.load %arg3[%c0_23, %c0_24] : memref<8x72xf32, #tpu.memory_space<vmem>>, vector<8x72xf32>
    %c0_25 = arith.constant 0 : index
    %c0_26 = arith.constant 0 : index
    %69 = vector.load %arg4[%c0_25, %c0_26] : memref<8x1xf32, #tpu.memory_space<vmem>>, vector<8x1xf32>
    %70 = vector.extract_strided_slice %0 {offsets = [0, 0, 0], sizes = [1, 4, 256], strides = [1, 1, 1]} : vector<1x8x256xf32> to vector<1x4x256xf32>
    %c0_27 = arith.constant 0 : index
    %c0_28 = arith.constant 0 : index
    %c0_29 = arith.constant 0 : index
    %71 = vector.load %arg5[%c0_27, %c0_28, %c0_29] : memref<1x12x256xf32, #tpu.memory_space<vmem>>, vector<1x4x256xf32>
    tpu.vector_store %arg5[%c0_27, %c0_28, %c0_29], %70 {strides = array<i32>} : memref<1x12x256xf32, #tpu.memory_space<vmem>>, vector<1x4x256xf32>,
    %c0_30 = arith.constant 0 : index
    %c0_31 = arith.constant 0 : index
    %c0_32 = arith.constant 0 : index
    %72 = vector.load %arg6[%c0_30, %c0_31, %c0_32] : memref<1x72x256xf32, #tpu.memory_space<vmem>>, vector<1x72x256xf32>
    %73 = vector.shape_cast %72 : vector<1x72x256xf32> to vector<72x256xf32>
    %cst = arith.constant dense<0.000000e+00> : vector<8x256xf32>
    %74 = tpu.matmul %68, %73, %cst {dimension_numbers = #tpu.dot_dimension_numbers<[1], [0], [0], [1], [0, 0, 1, 1], [], []>} : vector<8x72xf32>, vector<72x256xf32>, vector<8x256xf32> -> vector<8x256xf32>
    %75 = vector.broadcast %69 : vector<8x1xf32> to vector<8x256xf32>
    %76 = arith.addf %74, %75 : vector<8x256xf32>
    %cst_33 = arith.constant 0.000000e+00 : f32
    %77 = vector.broadcast %cst_33 : f32 to vector<8x256xf32>
    %78 = arith.maximumf %76, %77 : vector<8x256xf32>
    %c0_34 = arith.constant 0 : index
    %c4 = arith.constant 4 : index
    %c0_35 = arith.constant 0 : index
    %79 = vector.load %arg5[%c0_34, %c4, %c0_35] : memref<1x12x256xf32, #tpu.memory_space<vmem>>, vector<1x8x256xf32>
    %80 = vector.shape_cast %79 : vector<1x8x256xf32> to vector<8x256xf32>
    %81 = vector.shape_cast %78 : vector<8x256xf32> to vector<1x8x256xf32>
    tpu.vector_store %arg5[%c0_34, %c4, %c0_35], %81 {strides = array<i32>} : memref<1x12x256xf32, #tpu.memory_space<vmem>>, vector<1x8x256xf32>,
    return
  }
  func.func @transform_0(%arg0: i32) -> (i32, i32, i32) {
    %c0_i32 = arith.constant 0 : i32
    %c0_i32_0 = arith.constant 0 : i32
    %c0_i32_1 = arith.constant 0 : i32
    return %arg0, %c0_i32, %c0_i32_0 : i32, i32, i32
  }
  func.func @transform_1(%arg0: i32) -> (i32, i32) {
    %c0_i32 = arith.constant 0 : i32
    %c0_i32_0 = arith.constant 0 : i32
    %c0_i32_1 = arith.constant 0 : i32
    return %c0_i32, %c0_i32_0 : i32, i32
  }
  func.func @transform_2(%arg0: i32) -> (i32, i32) {
    %c0_i32 = arith.constant 0 : i32
    %c0_i32_0 = arith.constant 0 : i32
    %c0_i32_1 = arith.constant 0 : i32
    return %c0_i32, %c0_i32_0 : i32, i32
  }
  func.func @transform_3(%arg0: i32) -> (i32, i32) {
    %c0_i32 = arith.constant 0 : i32
    %c0_i32_0 = arith.constant 0 : i32
    %c0_i32_1 = arith.constant 0 : i32
    return %c0_i32, %c0_i32_0 : i32, i32
  }
  func.func @transform_4(%arg0: i32) -> (i32, i32, i32) {
    %c0_i32 = arith.constant 0 : i32
    %c0_i32_0 = arith.constant 0 : i32
    %c0_i32_1 = arith.constant 0 : i32
    return %arg0, %c0_i32, %c0_i32_0 : i32, i32, i32
  }
}

</mosaic_0001>

<llo_original>
// kernel: tpu_custom_call.1
$region0: #{tpu_custom_call.1}
  #allocation0 [shape = 'u32[]', space=smem, size = 0x4, offset = 0x4, fixed_abs, tag = 'smem constant byte address 0x4 - core index']
  #allocation1 [shape = 'u32[144,128]{1,0:T(1,128)}', space=vmem, size = 0x12000, scoped, tag = 'internal scratch']
  #allocation2 [shape = 'f32[1,72,256]{2,1,0:T(8,128)}', space=vmem, size = 0x12000, scoped, tag = 'scratch operand']
  %s0 = inlined_call_operand.hbm [shape: f32[2,8,256], index: 0, kind: input, shape index: {}]
  %s1 = inlined_call_operand.hbm [shape: f32[9,256], index: 1, kind: input, shape index: {}]
  %s2 = inlined_call_operand.vmem [shape: f32[8,72], index: 2, kind: input, shape index: {}]
  %s3 = inlined_call_operand.vmem [shape: f32[8,1], index: 3, kind: input, shape index: {}]
  %s4 = inlined_call_operand.vmem [shape: f32[2,12,256], index: 4, kind: output, shape index: {}]
  %s5 = sld [smem:[#allocation0]]
  $region57: #{tpu_custom_call.1} parent=0
    _
  %s7 = ssub.s32 1, %s5
  %s8 = scalar_select 0, %s7, %s5
  $region1: #{tpu_custom_call.1} parent=0
    #allocation3 [shape = 'u8[16384]{0}', space=vmem, size = 0x4000, scoped, tag = 'input window, operand 0']
    #allocation4 [shape = 's32[2]{0}', space=sflag, size = 0x8, scoped, tag = 'scoped memory for tpu_custom_call.1']
    #allocation5 [shape = 'u8[16384]{0}', space=vmem, size = 0x4000, scoped, tag = 'input window, operand 1, single buffered']
    #allocation6 [shape = 's32[1]{0}', space=sflag, size = 0x4, scoped, tag = 'scoped memory for tpu_custom_call.1']
    %9 = vsyncpa [#allocation4], 0
    %s10 = scalar_lea.sflag [#allocation4], 1
    %11 = vsyncpa %s10, 0
    %12 = vsyncpa [#allocation6], 0
    loop: start=0, step=1, limit=4
    $region2: #{tpu_custom_call.1} parent=1 // loop_pre_header
      _
    $region3: #{tpu_custom_call.1} parent=1 // loop_header
      %s14 = sphi 0, %s18
      %p15 = scmp.ge.s32.totalorder %s14, 4
      %s24 = sphi 0, %s26
      %s27 = sphi 0, %s24
      %s28 = sphi 0, %s27
      %s44 = sphi 0, %s28
      %s48 = sphi 0, %s48
      %s50 = sphi 0, %s48
      %s51 = sphi 0, %s50
      %s65 = sphi 0, %s51
      %s69 = sphi 0, %s69
      %s71 = sphi 0, %s69
      %s72 = sphi 0, %s71
      %s86 = sphi 0, %s72
      %s90 = sphi 0, %s90
      %s92 = sphi 0, %s90
      %s93 = sphi 0, %s92
      %s107 = sphi 0, %s93
      %s113 = sphi 0, %s115
      %s116 = sphi 0, %s113
      %s117 = sphi 0, %s116
      %s133 = sphi 0, %s117
    $region4: #{tpu_custom_call.1} parent=1 // loop_header_branch
      %17 = sbr.rel (%p15) target = $region8
    $region5: #{tpu_custom_call.1} parent=1 // loop_body
      %s19 = ssub.s32 %s14, 1
      %s20 = ssub.s32 %s14, 2
      %s21 = sadd.s32 %s14, 1
      %s22 = ssub.s32 %s14, %s21
      %p23 = scmp.eq.s32.totalorder %s22, 0
      %s25 = sadd.s32 %s24, 1
      %s26 = scalar_select %p23, %s24, %s25
      %p29 = pneg %p23
      %p30 = scmp.eq.s32.totalorder %s14, 1
      %p31 = por %p29, %p30
      %p32 = scmp.ne.s32.totalorder %s24, %s27
      %p33 = scmp.eq.s32.totalorder %s14, 0
      %p34 = por %p32, %p33
      %p35 = scmp.ne.s32.totalorder %s24, %s27
      %p36 = scmp.eq.s32.totalorder %s19, 1
      %p37 = por %p35, %p36
      %p38 = scmp.ne.s32.totalorder %s27, %s28
      %p39 = scmp.eq.s32.totalorder %s19, 0
      %p40 = por %p38, %p39
      %p41 = scmp.ne.s32.totalorder %s27, %s28
      %p42 = scmp.eq.s32.totalorder %s20, 1
      %p43 = por %p41, %p42
      %p45 = scmp.ne.s32.totalorder %s28, %s44
      %p46 = scmp.eq.s32.totalorder %s20, 0
      %p47 = por %p45, %p46
      %s49 = sadd.s32 %s48, 1
      %p52 = scmp.eq.s32.totalorder %s14, 1
      %p53 = scmp.ne.s32.totalorder %s48, %s50
      %p54 = scmp.eq.s32.totalorder %s14, 0
      %p55 = por %p53, %p54
      %p56 = scmp.ne.s32.totalorder %s48, %s50
      %p57 = scmp.eq.s32.totalorder %s19, 1
      %p58 = por %p56, %p57
      %p59 = scmp.ne.s32.totalorder %s50, %s51
      %p60 = scmp.eq.s32.totalorder %s19, 0
      %p61 = por %p59, %p60
      %p62 = scmp.ne.s32.totalorder %s50, %s51
      %p63 = scmp.eq.s32.totalorder %s20, 1
      %p64 = por %p62, %p63
      %p66 = scmp.ne.s32.totalorder %s51, %s65
      %p67 = scmp.eq.s32.totalorder %s20, 0
      %p68 = por %p66, %p67
      %s70 = sadd.s32 %s69, 1
      %p73 = scmp.eq.s32.totalorder %s14, 1
      %p74 = scmp.ne.s32.totalorder %s69, %s71
      %p75 = scmp.eq.s32.totalorder %s14, 0
      %p76 = por %p74, %p75
      %p77 = scmp.ne.s32.totalorder %s69, %s71
      %p78 = scmp.eq.s32.totalorder %s19, 1
      %p79 = por %p77, %p78
      %p80 = scmp.ne.s32.totalorder %s71, %s72
      %p81 = scmp.eq.s32.totalorder %s19, 0
      %p82 = por %p80, %p81
      %p83 = scmp.ne.s32.totalorder %s71, %s72
      %p84 = scmp.eq.s32.totalorder %s20, 1
      %p85 = por %p83, %p84
      %p87 = scmp.ne.s32.totalorder %s72, %s86
      %p88 = scmp.eq.s32.totalorder %s20, 0
      %p89 = por %p87, %p88
      %s91 = sadd.s32 %s90, 1
      %p94 = scmp.eq.s32.totalorder %s14, 1
      %p95 = scmp.ne.s32.totalorder %s90, %s92
      %p96 = scmp.eq.s32.totalorder %s14, 0
      %p97 = por %p95, %p96
      %p98 = scmp.ne.s32.totalorder %s90, %s92
      %p99 = scmp.eq.s32.totalorder %s19, 1
      %p100 = por %p98, %p99
      %p101 = scmp.ne.s32.totalorder %s92, %s93
      %p102 = scmp.eq.s32.totalorder %s19, 0
      %p103 = por %p101, %p102
      %p104 = scmp.ne.s32.totalorder %s92, %s93
      %p105 = scmp.eq.s32.totalorder %s20, 1
      %p106 = por %p104, %p105
      %p108 = scmp.ne.s32.totalorder %s93, %s107
      %p109 = scmp.eq.s32.totalorder %s20, 0
      %p110 = por %p108, %p109
      %s111 = ssub.s32 %s14, %s21
      %p112 = scmp.eq.s32.totalorder %s111, 0
      %s114 = sadd.s32 %s113, 1
      %s115 = scalar_select %p112, %s113, %s114
      %p118 = pneg %p112
      %p119 = scmp.eq.s32.totalorder %s14, 1
      %p120 = por %p118, %p119
      %p121 = scmp.ne.s32.totalorder %s113, %s116
      %p122 = scmp.eq.s32.totalorder %s14, 0
      %p123 = por %p121, %p122
      %p124 = scmp.ne.s32.totalorder %s113, %s116
      %p125 = scmp.eq.s32.totalorder %s19, 1
      %p126 = por %p124, %p125
      %p127 = scmp.ne.s32.totalorder %s116, %s117
      %p128 = scmp.eq.s32.totalorder %s19, 0
      %p129 = por %p127, %p128
      %p130 = scmp.ne.s32.totalorder %s116, %s117
      %p131 = scmp.eq.s32.totalorder %s20, 1
      %p132 = por %p130, %p131
      %p134 = scmp.ne.s32.totalorder %s117, %s133
      %p135 = scmp.eq.s32.totalorder %s20, 0
      %p136 = por %p134, %p135
      %p137 = scmp.le.s32.totalorder 1, %s14
      %p138 = scmp.lt.s32.totalorder %s14, 3
      %p139 = pnand %p137, %p138
      %p140 = pneg %p139
      // Predicated region
      $region9: #{tpu_custom_call.1} parent=5 // pred_check
        _
      $region10: #{tpu_custom_call.1} parent=5 // pred_check_branch
        %142 = sbr.rel (%p139) target = $region12
      $region11: #{tpu_custom_call.1} parent=5 // pred_region
        %s143 = ssub.s32 %s14, 1
        // Predicated region
        $region13: #{tpu_custom_call.1} parent=11 // pred_check
          %p144 = pneg %p61
        $region14: #{tpu_custom_call.1} parent=11 // pred_check_branch
          %146 = sbr.rel (%p144) target = $region16
        $region15: #{tpu_custom_call.1} parent=11 // pred_region
          %s148 = ssub.s32 512, 512
          %149 = vsyncadd [#allocation6], %s148
          %s150 = sshll.u32 [#allocation5], 4
          %s151 = int_to_ptr.vmem [resolvable:$true] %s150
          %156 = dma.hbm_to_vmem [thread:$0]  %s1, 512, %s151, [#allocation6], 256, 256, 16
        $region16: #{tpu_custom_call.1} parent=11 // pred_fallthru
          _
        // Predicated region
        $region17: #{tpu_custom_call.1} parent=11 // pred_check
          %p157 = pneg %p82
        $region18: #{tpu_custom_call.1} parent=11 // pred_check_branch
          %159 = sbr.rel (%p157) target = $region20
        $region19: #{tpu_custom_call.1} parent=11 // pred_region
          _
        $region20: #{tpu_custom_call.1} parent=11 // pred_fallthru
          _
        // Predicated region
        $region21: #{tpu_custom_call.1} parent=11 // pred_check
          %p160 = pneg %p103
        $region22: #{tpu_custom_call.1} parent=11 // pred_check_branch
          %162 = sbr.rel (%p160) target = $region24
        $region23: #{tpu_custom_call.1} parent=11 // pred_region
          _
        $region24: #{tpu_custom_call.1} parent=11 // pred_fallthru
          _
      $region12: #{tpu_custom_call.1} parent=5 // pred_fallthru
        _
      %p163 = scmp.lt.s32.totalorder %s14, 2
      // Predicated region
      $region25: #{tpu_custom_call.1} parent=5 // pred_check
        %p164 = pneg %p163
      $region26: #{tpu_custom_call.1} parent=5 // pred_check_branch
        %166 = sbr.rel (%p164) target = $region28
      $region27: #{tpu_custom_call.1} parent=5 // pred_region
        // Predicated region
        $region29: #{tpu_custom_call.1} parent=27 // pred_check
          %p167 = pneg %p34
        $region30: #{tpu_custom_call.1} parent=27 // pred_check_branch
          %169 = sbr.rel (%p167) target = $region32
        $region31: #{tpu_custom_call.1} parent=27 // pred_region
          %s170 = sand.u32 %s24, 1
          %s171 = scalar_lea.sflag [#allocation4], %s170
          %s172 = sand.u32 %s24, 1
          %s173 = smul.addr %s172, 16
          %s174 = scalar_lea.vmem [#allocation3], %s173
          %s176 = ssub.s32 256, 256
          %177 = vsyncadd %s171, %s176
          %s178 = smul.addr %s14, 2
          %s179 = smul.addr %s178, 128
          %s180 = scalar_lea.hbm %s0, %s179
          %s182 = sshll.u32 %s174, 4
          %s183 = int_to_ptr.vmem [resolvable:$true] %s182
          %185 = dma.hbm_to_vmem [thread:$0]  %s180, 256, %s183, %s171
        $region32: #{tpu_custom_call.1} parent=27 // pred_fallthru
          _
      $region28: #{tpu_custom_call.1} parent=5 // pred_fallthru
        _
      %p186 = scmp.le.s32.totalorder 1, %s14
      %p187 = scmp.lt.s32.totalorder %s14, 3
      %p188 = pnand %p186, %p187
      %p189 = pneg %p188
      // Predicated region
      $region33: #{tpu_custom_call.1} parent=5 // pred_check
        _
      $region34: #{tpu_custom_call.1} parent=5 // pred_check_branch
        %191 = sbr.rel (%p188) target = $region36
      $region35: #{tpu_custom_call.1} parent=5 // pred_region
        %s192 = ssub.s32 %s14, 1
        %s193 = sand.u32 %s27, 1
        %s194 = scalar_lea.sflag [#allocation4], %s193
        %s195 = sand.u32 %s27, 1
        %s196 = smul.addr %s195, 16
        %s197 = scalar_lea.vmem [#allocation3], %s196
        // Predicated region
        $region37: #{tpu_custom_call.1} parent=35 // pred_check
          %p198 = pneg %p40
        $region38: #{tpu_custom_call.1} parent=35 // pred_check_branch
          %200 = sbr.rel (%p198) target = $region40
        $region39: #{tpu_custom_call.1} parent=35 // pred_region
          %201 = dma.done %s194, 256
        $region40: #{tpu_custom_call.1} parent=35 // pred_fallthru
          _
        // Predicated region
        $region41: #{tpu_custom_call.1} parent=35 // pred_check
          %p202 = pneg %p61
        $region42: #{tpu_custom_call.1} parent=35 // pred_check_branch
          %204 = sbr.rel (%p202) target = $region44
        $region43: #{tpu_custom_call.1} parent=35 // pred_region
          %205 = dma.done [#allocation6], 512
        $region44: #{tpu_custom_call.1} parent=35 // pred_fallthru
          _
        %s206 = sand.u32 %s27, 1
        %s207 = scalar_lea.sflag [#allocation4], %s206
        %s208 = sand.u32 %s27, 1
        %s209 = smul.addr %s208, 16
        %s210 = scalar_lea.vmem [#allocation3], %s209
        %p211 = pneg %p40
        %p212 = pneg %p37
        %p213 = pneg %p61
        %p214 = pneg %p58
        %p215 = pneg %p82
        %p216 = pneg %p79
        %p217 = pneg %p103
        %p218 = pneg %p100
        %p219 = pneg %p129
        %p220 = pneg %p126
        %p221 = scmp.lt.s32.totalorder %s19, 1
        %s222 = scalar_select %p221, %s19, 1
        %s223 = smul.addr %s222, 4
        %s224 = smul.addr %s223, 8
        %s225 = scalar_lea.vmem %s4, %s224
        %p226 = scmp.lt.s32.totalorder %s19, 1
        %s227 = scalar_select %p226, %s19, 1
        %s228 = smul.addr %s227, 4
        %s229 = smul.addr %s228, 8
        %s230 = scalar_lea.vmem %s4, %s229
        %v231 = vld [vmem:[%s197] sm:$0xff]
        %v232 = vld [vmem:[%s197 + $0x8] sm:$0xff]
        %v233 = vld [vmem:[#allocation5] sm:$0xff]
        %v234 = vld [vmem:[#allocation5 + $0x8] sm:$0xff]
        %v235 = vld [vmem:[#allocation5 + $0x10] sm:$0x1]
        %v236 = vld [vmem:[#allocation5 + $0x18] sm:$0x1]
        %237 = vrot.lane.b32.xlu0 %v231, 17
        %v238 = vpop.permute.xlu0 %237
        %239 = vrot.lane.b32.xlu0 %v232, 17
        %v240 = vpop.permute.xlu0 %239
        %v241 = vlaneseq
        %v242 = vand.u32 %v241, 127
        %vm243 = vcmp.lt.s32.totalorder %v242, 17
        %v244 = vsel %vm243, %v238, %v240
        %v245 = vsel %vm243, %v240, %v238
        %v246 = vlaneseq
        %v247 = vshrl.u32 %v246, 7
        %v248 = vsub.s32 0, %v247
        %v249 = vrot.slane %v233, %v248
        %v250 = vlaneseq
        %v251 = vshrl.u32 %v250, 7
        %v252 = vsub.s32 0, %v251
        %v253 = vrot.slane %v234, %v252
        %v254 = vmul.f32 %v245, %v249
        %v255 = vmul.f32 %v244, %v253
        %256 = vst [vmem:[#allocation2] sm:$0xff] %v254
        %257 = vst [vmem:[#allocation2 + $0x8] sm:$0xff] %v255
        %258 = vrot.lane.b32.xlu0 %v231, 16
        %v259 = vpop.permute.xlu0 %258
        %260 = vrot.lane.b32.xlu0 %v232, 16
        %v261 = vpop.permute.xlu0 %260
        %vm262 = vcmp.lt.s32.totalorder %v242, 16
        %v263 = vsel %vm262, %v259, %v261
        %v264 = vsel %vm262, %v261, %v259
        %v265 = vlaneseq
        %v266 = vshrl.u32 %v265, 7
        %v267 = vsub.s32 1, %v266
        %v268 = vrot.slane %v233, %v267
        %v269 = vlaneseq
        %v270 = vshrl.u32 %v269, 7
        %v271 = vsub.s32 1, %v270
        %v272 = vrot.slane %v234, %v271
        %v273 = vmul.f32 %v264, %v268
        %v274 = vmul.f32 %v263, %v272
        %275 = vst [vmem:[#allocation2 + $0x10] sm:$0xff] %v273
        %276 = vst [vmem:[#allocation2 + $0x18] sm:$0xff] %v274
        %277 = vrot.lane.b32.xlu0 %v231, 15
        %v278 = vpop.permute.xlu0 %277
        %279 = vrot.lane.b32.xlu0 %v232, 15
        %v280 = vpop.permute.xlu0 %279
        %vm281 = vcmp.lt.s32.totalorder %v242, 15
        %v282 = vsel %vm281, %v278, %v280
        %v283 = vsel %vm281, %v280, %v278
        %v284 = vlaneseq
        %v285 = vshrl.u32 %v284, 7
        %v286 = vsub.s32 2, %v285
        %v287 = vrot.slane %v233, %v286
        %v288 = vlaneseq
        %v289 = vshrl.u32 %v288, 7
        %v290 = vsub.s32 2, %v289
        %v291 = vrot.slane %v234, %v290
        %v292 = vmul.f32 %v283, %v287
        %v293 = vmul.f32 %v282, %v291
        %294 = vst [vmem:[#allocation2 + $0x20] sm:$0xff] %v292
        %295 = vst [vmem:[#allocation2 + $0x28] sm:$0xff] %v293
        %296 = vrot.lane.b32.xlu0 %v231, 1
        %v297 = vpop.permute.xlu0 %296
        %298 = vrot.lane.b32.xlu0 %v232, 1
        %v299 = vpop.permute.xlu0 %298
        %vm300 = vcmp.lt.s32.totalorder %v242, 1
        %v301 = vsel %vm300, %v297, %v299
        %v302 = vsel %vm300, %v299, %v297
        %v303 = vlaneseq
        %v304 = vshrl.u32 %v303, 7
        %v305 = vsub.s32 3, %v304
        %v306 = vrot.slane %v233, %v305
        %v307 = vlaneseq
        %v308 = vshrl.u32 %v307, 7
        %v309 = vsub.s32 3, %v308
        %v310 = vrot.slane %v234, %v309
        %v311 = vmul.f32 %v302, %v306
        %v312 = vmul.f32 %v301, %v310
        %313 = vst [vmem:[#allocation2 + $0x30] sm:$0xff] %v311
        %314 = vst [vmem:[#allocation2 + $0x38] sm:$0xff] %v312
        %315 = vst [vmem:[#allocation2 + $0x40] sm:$0xff] %v231
        %316 = vst [vmem:[#allocation2 + $0x48] sm:$0xff] %v232
        %317 = vrot.lane.b32.xlu0 %v231, 127
        %v318 = vpop.permute.xlu0 %317
        %319 = vrot.lane.b32.xlu0 %v232, 127
        %v320 = vpop.permute.xlu0 %319
        %vm321 = vcmp.lt.s32.totalorder %v242, 127
        %v322 = vsel %vm321, %v318, %v320
        %v323 = vsel %vm321, %v320, %v318
        %v324 = vlaneseq
        %v325 = vshrl.u32 %v324, 7
        %v326 = vsub.s32 5, %v325
        %v327 = vrot.slane %v233, %v326
        %v328 = vlaneseq
        %v329 = vshrl.u32 %v328, 7
        %v330 = vsub.s32 5, %v329
        %v331 = vrot.slane %v234, %v330
        %v332 = vmul.f32 %v322, %v327
        %v333 = vmul.f32 %v323, %v331
        %334 = vst [vmem:[#allocation2 + $0x50] sm:$0xff] %v332
        %335 = vst [vmem:[#allocation2 + $0x58] sm:$0xff] %v333
        %336 = vrot.lane.b32.xlu0 %v231, 113
        %v337 = vpop.permute.xlu0 %336
        %338 = vrot.lane.b32.xlu0 %v232, 113
        %v339 = vpop.permute.xlu0 %338
        %vm340 = vcmp.lt.s32.totalorder %v242, 113
        %v341 = vsel %vm340, %v337, %v339
        %v342 = vsel %vm340, %v339, %v337
        %v343 = vlaneseq
        %v344 = vshrl.u32 %v343, 7
        %v345 = vsub.s32 6, %v344
        %v346 = vrot.slane %v233, %v345
        %v347 = vlaneseq
        %v348 = vshrl.u32 %v347, 7
        %v349 = vsub.s32 6, %v348
        %v350 = vrot.slane %v234, %v349
        %v351 = vmul.f32 %v341, %v346
        %v352 = vmul.f32 %v342, %v350
        %353 = vst [vmem:[#allocation2 + $0x60] sm:$0xff] %v351
        %354 = vst [vmem:[#allocation2 + $0x68] sm:$0xff] %v352
        %355 = vrot.lane.b32.xlu0 %v231, 112
        %v356 = vpop.permute.xlu0 %355
        %357 = vrot.lane.b32.xlu0 %v232, 112
        %v358 = vpop.permute.xlu0 %357
        %vm359 = vcmp.lt.s32.totalorder %v242, 112
        %v360 = vsel %vm359, %v356, %v358
        %v361 = vsel %vm359, %v358, %v356
        %v362 = vlaneseq
        %v363 = vshrl.u32 %v362, 7
        %v364 = vsub.s32 7, %v363
        %v365 = vrot.slane %v233, %v364
        %v366 = vlaneseq
        %v367 = vshrl.u32 %v366, 7
        %v368 = vsub.s32 7, %v367
        %v369 = vrot.slane %v234, %v368
        %v370 = vmul.f32 %v360, %v365
        %v371 = vmul.f32 %v361, %v369
        %372 = vst [vmem:[#allocation2 + $0x70] sm:$0xff] %v370
        %373 = vst [vmem:[#allocation2 + $0x78] sm:$0xff] %v371
        %374 = vrot.lane.b32.xlu0 %v231, 111
        %v375 = vpop.permute.xlu0 %374
        %376 = vrot.lane.b32.xlu0 %v232, 111
        %v377 = vpop.permute.xlu0 %376
        %vm378 = vcmp.lt.s32.totalorder %v242, 111
        %v379 = vsel %vm378, %v375, %v377
        %v380 = vsel %vm378, %v377, %v375
        %v381 = vlaneseq
        %v382 = vshrl.u32 %v381, 7
        %v383 = vsub.s32 0, %v382
        %v384 = vrot.slane %v235, %v383
        %v385 = vlaneseq
        %v386 = vshrl.u32 %v385, 7
        %v387 = vsub.s32 0, %v386
        %v388 = vrot.slane %v236, %v387
        %v389 = vmul.f32 %v379, %v384
        %v390 = vmul.f32 %v380, %v388
        %391 = vst [vmem:[#allocation2 + $0x80] sm:$0xff] %v389
        %392 = vst [vmem:[#allocation2 + $0x88] sm:$0xff] %v390
        %v393 = vld [vmem:[%s2] sm:$0xff]
        %v394 = vld [vmem:[%s3] sm:$0xff]
        %395 = vst [vmem:[%s230] sm:$0xf] %v231
        %396 = vst [vmem:[%s230 + $0x8] sm:$0xf] %v232
        %v397 = vld [vmem:[#allocation2] sm:$0xff]
        %v398 = vld [vmem:[#allocation2 + $0x8] sm:$0xff]
        %v399 = vld [vmem:[#allocation2 + $0x10] sm:$0xff]
        %v400 = vld [vmem:[#allocation2 + $0x18] sm:$0xff]
        %v401 = vld [vmem:[#allocation2 + $0x20] sm:$0xff]
        %v402 = vld [vmem:[#allocation2 + $0x28] sm:$0xff]
        %v403 = vld [vmem:[#allocation2 + $0x30] sm:$0xff]
        %v404 = vld [vmem:[#allocation2 + $0x38] sm:$0xff]
        %v405 = vld [vmem:[#allocation2 + $0x40] sm:$0xff]
        %v406 = vld [vmem:[#allocation2 + $0x48] sm:$0xff]
        %v407 = vld [vmem:[#allocation2 + $0x50] sm:$0xff]
        %v408 = vld [vmem:[#allocation2 + $0x58] sm:$0xff]
        %v409 = vld [vmem:[#allocation2 + $0x60] sm:$0xff]
        %v410 = vld [vmem:[#allocation2 + $0x68] sm:$0xff]
        %v411 = vld [vmem:[#allocation2 + $0x70] sm:$0xff]
        %v412 = vld [vmem:[#allocation2 + $0x78] sm:$0xff]
        %v413 = vld [vmem:[#allocation2 + $0x80] sm:$0xff]
        %v414 = vld [vmem:[#allocation2 + $0x88] sm:$0xff]
        %416 = vset.pattern.permute.xlu0 0
        %417 = vperm.xlu0 %416, %v394
        %v418 = vpop.permute.xlu0 %417
        %vm420 = vcmask 588800
        %v422 = vsel %vm420, %v393, 0
        %424 = vmatprep.subr.mxu0 %v398
        %425 = vmatpush1.msra.mxu0 %v397
        %426 = vmatprep.subr.mxu0 %v400
        %427 = vmatpush1.msra.mxu0 %v399
        %428 = vmatprep.subr.mxu0 %v402
        %429 = vmatpush1.msra.mxu0 %v401
        %430 = vmatprep.subr.mxu0 %v404
        %431 = vmatpush1.msra.mxu0 %v403
        %432 = vmatprep.subr.mxu0 %v406
        %433 = vmatpush1.msra.mxu0 %v405
        %434 = vmatprep.subr.mxu0 %v408
        %435 = vmatpush1.msra.mxu0 %v407
        %436 = vmatprep.subr.mxu0 %v410
        %437 = vmatpush1.msra.mxu0 %v409
        %438 = vmatprep.subr.mxu0 %v412
        %439 = vmatpush1.msra.mxu0 %v411
        %440 = vmatprep.subr.mxu0 %v414
        %441 = vmatpush1.msra.mxu0 %v413
        %442 = vmatprep.subr.mxu0 0.0
        %443 = vmatpush1.msra.mxu0 0.0
        %444 = vmatprep.subr.mxu0 0.0
        %445 = vmatpush1.msra.mxu0 0.0
        %446 = vmatprep.subr.mxu0 0.0
        %447 = vmatpush1.msra.mxu0 0.0
        %448 = vmatprep.subr.mxu0 0.0
        %449 = vmatpush1.msra.mxu0 0.0
        %450 = vmatprep.subr.mxu0 0.0
        %451 = vmatpush1.msra.mxu0 0.0
        %452 = vmatprep.subr.mxu0 0.0
        %453 = vmatpush1.msra.mxu0 0.0
        %454 = vmatprep.subr.mxu0 0.0
        %455 = vmatpush1.msra.mxu0 0.0
        %456 = vmatprep.subr.mxu0 0.0
        %457 = vmatpush1.msra.mxu0 0.0
        %458 = vmatprep.subr.mxu0 0.0
        %459 = vmatpush1.msra.mxu0 0.0
        %460 = vmatprep.subr.mxu0 0.0
        %461 = vmatpush1.msra.mxu0 0.0
        %462 = vmatprep.subr.mxu0 0.0
        %463 = vmatpush1.msra.mxu0 0.0
        %464 = vmatprep.subr.mxu0 0.0
        %465 = vmatpush1.msra.mxu0 0.0
        %466 = vmatprep.subr.mxu0 0.0
        %467 = vmatpush1.msra.mxu0 0.0
        %468 = vmatprep.subr.mxu0 0.0
        %469 = vmatpush1.msra.mxu0 0.0
        %470 = vmatprep.subr.mxu0 0.0
        %471 = vmatpush1.msra.mxu0 0.0
        %472 = vmatprep.subr.mxu0 0.0
        %473 = vmatpush1.msra.mxu0 0.0
        %474 = vmatprep.subr.mxu0 0.0
        %475 = vmatpush1.msra.mxu0 0.0
        %476 = vmatprep.subr.mxu0 0.0
        %477 = vmatpush1.msra.mxu0 0.0
        %478 = vmatprep.subr.mxu0 0.0
        %479 = vmatpush1.msra.mxu0 0.0
        %480 = vmatprep.subr.mxu0 0.0
        %481 = vmatpush1.msra.mxu0 0.0
        %482 = vmatprep.subr.mxu0 0.0
        %483 = vmatpush1.msra.mxu0 0.0
        %484 = vmatprep.subr.mxu0 0.0
        %485 = vmatpush1.msra.mxu0 0.0
        %486 = vmatprep.subr.mxu0 0.0
        %487 = vmatpush1.msra.mxu0 0.0
        %488 = vmatprep.mubr.f32.mxu0 0.0
        %489 = vmatmul.mubr.f32.gmra.mrb[0].mxu0 %v422
        %v490 = vpop.f32.mrb[0].mxu0
        %v491 = vadd.f32 %v418, %v490
        %v492 = vpop.f32.mrb[0].mxu0
        %v493 = vadd.f32 %v418, %v492
        %494 = vdwg.mxu0
        %v495 = vmax.f32 %v491, 0.0
        %v496 = vmax.f32 %v493, 0.0
        %v499 = vrot.slane %v495, 4
        %v500 = vrot.slane %v496, 4
        %503 = vst [vmem:[%s230] sm:$0xf0] %v499
        %504 = vst [vmem:[%s230 + $0x8] sm:$0xf0] %v500
        %505 = vst [vmem:[%s230 + $0x10] sm:$0xf] %v499
        %506 = vst [vmem:[%s230 + $0x18] sm:$0xf] %v500
        %p507 = scmp.lt.s32.totalorder %s19, 1
        %s508 = scalar_select %p507, %s19, 1
        %s509 = smul.addr %s508, 4
        %s510 = smul.addr %s509, 8
        %s511 = scalar_lea.vmem %s4, %s510
        // Predicated region
        $region45: #{tpu_custom_call.1} parent=35 // pred_check
          %p512 = pneg %p126
        $region46: #{tpu_custom_call.1} parent=35 // pred_check_branch
          %514 = sbr.rel (%p512) target = $region48
        $region47: #{tpu_custom_call.1} parent=35 // pred_region
          _
        $region48: #{tpu_custom_call.1} parent=35 // pred_fallthru
          _
      $region36: #{tpu_custom_call.1} parent=5 // pred_fallthru
        _
      %p515 = scmp.le.s32.totalorder 2, %s14
      // Predicated region
      $region49: #{tpu_custom_call.1} parent=5 // pred_check
        %p516 = pneg %p515
      $region50: #{tpu_custom_call.1} parent=5 // pred_check_branch
        %518 = sbr.rel (%p516) target = $region52
      $region51: #{tpu_custom_call.1} parent=5 // pred_region
        %s519 = ssub.s32 %s14, 2
        // Predicated region
        $region53: #{tpu_custom_call.1} parent=51 // pred_check
          %p520 = pneg %p132
        $region54: #{tpu_custom_call.1} parent=51 // pred_check_branch
          %522 = sbr.rel (%p520) target = $region56
        $region55: #{tpu_custom_call.1} parent=51 // pred_region
          %p523 = scmp.lt.s32.totalorder %s20, 1
          %s524 = scalar_select %p523, %s20, 1
          %s525 = smul.addr %s524, 4
          %s526 = smul.addr %s525, 8
          %s527 = scalar_lea.vmem %s4, %s526
        $region56: #{tpu_custom_call.1} parent=51 // pred_fallthru
          _
      $region52: #{tpu_custom_call.1} parent=5 // pred_fallthru
        _
    $region6: #{tpu_custom_call.1} parent=1 // loop_footer
      %s18 = sadd.s32 1, %s14
    $region7: #{tpu_custom_call.1} parent=1 // loop_footer_branch
      %13 = sbr.rel target = $region3
    $region8: #{tpu_custom_call.1} parent=1 // loop_exit
      _
    %528 = vsyncpa [#allocation4], 1
    %s529 = scalar_lea.sflag [#allocation4], 1
    %530 = vsyncpa %s529, 1
    %531 = vsyncpa [#allocation6], 1

</llo_original>
